<compile_context>
chip_gen: v7x
topology: tpu7x:2x2x1
jax: 0.10.0
libtpu: 0.0.40
codegen_flags: <defaults>
</compile_context>

<pallas_src>
import functools
import math

import jax
import jax.numpy as jnp
from jax.experimental import pallas as pl
from jax.experimental.pallas import tpu as pltpu

LANE = 128          # TPU vreg lane width
_MIB = 1 << 20
_HAS_BUFFERED = hasattr(pl, "Buffered")


# --------------------------------------------------------------------------- #
# Kernel
# --------------------------------------------------------------------------- #
def ucvme_kernel(x_ref, w1_ref, b1_ref, w2_ref, b2_ref, wh_ref, bh_ref, head_ref):
    # Cast activations to the weight dtype only at the MXU inputs; bias add and
    # ReLU stay in f32 and accumulation is f32 via preferred_element_type.
    x = x_ref[...].astype(w1_ref.dtype)

    # encoder: Linear -> ReLU -> (Dropout=identity) -> Linear -> ReLU -> (Dropout=identity)
    h = jnp.dot(x, w1_ref[...], preferred_element_type=jnp.float32) + b1_ref[...]
    h = jnp.maximum(h, 0.0)
    # TODO(synk): nn.Dropout(p=0.3) training-mode masking (pltpu.prng_seed /
    # prng_random_bits + 1/(1-p) scaling) is not implemented; this is the
    # eval-mode (identity) forward.
    h = h.astype(w2_ref.dtype)
    h2 = jnp.dot(h, w2_ref[...], preferred_element_type=jnp.float32) + b2_ref[...]
    h2 = jnp.maximum(h2, 0.0)
    h2 = h2.astype(wh_ref.dtype)

    # Fused mean||logvar head: one MXU push, one lane-dense unmasked store.
    head_ref[...] = (
        jnp.dot(h2, wh_ref[...], preferred_element_type=jnp.float32) + bh_ref[...]
    ).astype(head_ref.dtype)


# --------------------------------------------------------------------------- #
# One-time parameter packing (outside the per-call hot path)
# --------------------------------------------------------------------------- #
def pack_params(w1, b1, w2, b2, wm, bm, wv, bv, *, compute_dtype=None):
    """Fuse + lane-pad the mean/logvar heads and (optionally) cast weights.

    Returns (packed_weights_tuple, out_dim).  Doing this once removes the
    per-forward concat/pad/cast XLA ops and their HBM round trips.
    Weights must already be [in_features, out_features]; biases end up f32
    with shape (1, N).
    """
    hidden = w1.shape[1]
    out_dim = wm.shape[1]
    fused = 2 * out_dim
    padded = pl.cdiv(fused, LANE) * LANE

    bm = jnp.asarray(bm, jnp.float32).reshape(1, out_dim)
    bv = jnp.asarray(bv, jnp.float32).reshape(1, out_dim)
    wh = jnp.zeros((hidden, padded), w1.dtype).at[:, :fused].set(
        jnp.concatenate([wm, wv], axis=1))
    bh = jnp.zeros((1, padded), jnp.float32).at[:, :fused].set(
        jnp.concatenate([bm, bv], axis=1))

    b1 = jnp.asarray(b1, jnp.float32).reshape(1, hidden)
    b2 = jnp.asarray(b2, jnp.float32).reshape(1, hidden)

    if compute_dtype is not None:
        # bf16 weights: half the weight DMA bytes + full-rate MXU; f32 accum in
        # kernel. Only worth it once hidden is scaled up (>= ~512).
        w1 = w1.astype(compute_dtype)
        w2 = w2.astype(compute_dtype)
        wh = wh.astype(compute_dtype)

    return (w1, b1, w2, b2, wh, bh), out_dim


# --------------------------------------------------------------------------- #
# Forward wrapper
# --------------------------------------------------------------------------- #
def _pick_block_b(B):
    # Each grid step costs ~0.35 us of overhead, so keep a 1-step grid for
    # small B.  For large batches pick >=2 steps of >=512 rows each so the
    # "parallel" batch axis shards across v7x's two TensorCores and stays near
    # the HBM roofline on v5e/v6e.
    if B % 8 or B < 1024:
        return B
    for tb in (1024, 512):
        if B % tb == 0:
            return tb
    return B


def _auto_vmem_limit(in_dim, x_itemsize, weights, tb, padded, out_dtype, *, weight_bufs):
    weight_bytes = sum(
        math.prod(w.shape) * jnp.dtype(w.dtype).itemsize for w in weights
    ) * weight_bufs
    io_bytes = 2 * (tb * in_dim * x_itemsize
                    + tb * padded * jnp.dtype(out_dtype).itemsize)
    need = int(1.25 * (weight_bytes + io_bytes)) + 2 * _MIB
    cap = 48 * _MIB  # safe headroom on v7x (64 MiB physical VMEM)
    if hasattr(pltpu, "get_tpu_info"):
        try:
            cap = max(cap, int(0.75 * pltpu.get_tpu_info().vmem_capacity_bytes))
        except Exception:
            pass
    return max(16 * _MIB, min(need, cap))


@functools.partial(
    jax.jit,
    static_argnames=("out_dim", "block_b", "out_dtype", "vmem_limit_bytes", "use_buffered"),
)
def _ucvme_forward_impl(x, w1, b1, w2, b2, wh, bh, *, out_dim, block_b,
                        out_dtype, vmem_limit_bytes, use_buffered):
    B, in_dim = x.shape
    hidden = w1.shape[1]
    padded = wh.shape[1]
    fused = 2 * out_dim

    tb = B if block_b is None else block_b
    if B % tb != 0:
        raise ValueError(f"block_b={tb} must divide batch size B={B}")
    if tb != B and tb % 8 != 0:
        raise ValueError(f"block_b={tb} must be a multiple of 8 (or equal to B={B})")
    grid_steps = B // tb

    single_buffer = use_buffered and _HAS_BUFFERED

    def weight_spec(shape):
        kwargs = {}
        if single_buffer:
            # Grid-invariant block: constant index_map means there is never a
            # second fetch to overlap, so single-buffer it to halve the
            # weights' VMEM footprint.  NOTE: if any weight index_map ever
            # becomes grid-varying (e.g. streaming w2 on v7x), switch that spec
            # back to >=2 buffers.
            kwargs["pipeline_mode"] = pl.Buffered(1)
        return pl.BlockSpec(shape, lambda i: (0, 0), **kwargs)

    in_specs = [
        pl.BlockSpec((tb, in_dim), lambda i: (i, 0)),  # x: tiled over batch
        weight_spec((in_dim, hidden)),   # w1
        weight_spec((1, hidden)),        # b1 (full-array (1,N) block)
        weight_spec((hidden, hidden)),   # w2
        weight_spec((1, hidden)),        # b2
        weight_spec((hidden, padded)),   # fused, lane-padded head weight (wm||wv)
        weight_spec((1, padded)),        # fused head bias (bm||bv)
    ]
    out_specs = pl.BlockSpec((tb, padded), lambda i: (i, 0))
    out_shape = jax.ShapeDtypeStruct((B, padded), out_dtype)

    if vmem_limit_bytes is None:
        vmem_limit_bytes = _auto_vmem_limit(
            in_dim, jnp.dtype(x.dtype).itemsize, (w1, b1, w2, b2, wh, bh),
            tb, padded, out_dtype, weight_bufs=1 if single_buffer else 2)

    head = pl.pallas_call(
        ucvme_kernel,
        out_shape=out_shape,
        grid_spec=pltpu.PrefetchScalarGridSpec(
            num_scalar_prefetch=0,
            grid=(grid_steps,),
            in_specs=in_specs,
            out_specs=out_specs,
        ),
        compiler_params=pltpu.CompilerParams(
            dimension_semantics=("parallel",),
            vmem_limit_bytes=int(vmem_limit_bytes),
        ),
    )(x, w1, b1, w2, b2, wh, bh)

    # Un-fuse outside the kernel (cheap XLA slices on the lane-dense output).
    return head[:, :out_dim], head[:, out_dim:fused]


def ucvme_forward(x, packed, out_dim, *, block_b=None,
                  out_dtype=jnp.float32, vmem_limit_bytes=None):
    """UCVME forward. `packed` comes from pack_params(). Returns (mean, logvar)."""
    if block_b is None:
        block_b = _pick_block_b(x.shape[0])
    try:
        out = _ucvme_forward_impl(
            x, *packed, out_dim=out_dim, block_b=block_b, out_dtype=out_dtype,
            vmem_limit_bytes=vmem_limit_bytes, use_buffered=True)
        return jax.block_until_ready(out)
    except Exception:
        # Fallback: default double-buffered weight specs if this JAX build
        # rejects a 1-deep pipeline for grid-invariant blocks.
        out = _ucvme_forward_impl(
            x, *packed, out_dim=out_dim, block_b=block_b, out_dtype=out_dtype,
            vmem_limit_bytes=vmem_limit_bytes, use_buffered=False)
        return jax.block_until_ready(out)


# --------------------------------------------------------------------------- #
# Init + pure-JAX reference
# --------------------------------------------------------------------------- #
def init_params(key, in_dim, out_dim, hidden):
    """Deterministic Kaiming-uniform-ish init (mirrors nn.Linear default bounds)."""
    ks = jax.random.split(key, 8)

    def linear(kw, kb, fan_in, fan_out):
        bound = 1.0 / jnp.sqrt(fan_in)
        w = jax.random.uniform(kw, (fan_in, fan_out), jnp.float32, -bound, bound)
        b = jax.random.uniform(kb, (1, fan_out), jnp.float32, -bound, bound)
        return w, b

    w1, b1 = linear(ks[0], ks[1], in_dim, hidden)
    w2, b2 = linear(ks[2], ks[3], hidden, hidden)
    wm, bm = linear(ks[4], ks[5], hidden, out_dim)
    wv, bv = linear(ks[6], ks[7], hidden, out_dim)
    return w1, b1, w2, b2, wm, bm, wv, bv


def reference_forward(x, w1, b1, w2, b2, wm, bm, wv, bv):
    h = jnp.maximum(x @ w1 + b1, 0.0)
    h = jnp.maximum(h @ w2 + b2, 0.0)
    return h @ wm + bm, h @ wv + bv


if __name__ == "__main__":
    # Small shapes consistent with the module: batch=8, in_dim=16, hidden=32, out_dim=4
    B, IN_DIM, HIDDEN, OUT_DIM = 8, 16, 32, 4

    key = jax.random.PRNGKey(0)
    kx, kp = jax.random.split(key)
    x = jax.random.normal(kx, (B, IN_DIM), jnp.float32)
    raw = init_params(kp, IN_DIM, OUT_DIM, HIDDEN)

    # One-time packing (head fusion + lane padding) outside the hot path.
    packed, out_dim = pack_params(*raw)

    mean, logvar = ucvme_forward(x, packed, out_dim)
    jax.block_until_ready((mean, logvar))

    # Sanity check against plain-JAX reference.
    mean_ref, logvar_ref = reference_forward(x, *raw)
    assert mean.shape == (B, OUT_DIM) and logvar.shape == (B, OUT_DIM)
    assert jnp.allclose(mean, mean_ref, atol=1e-5, rtol=1e-5)
    assert jnp.allclose(logvar, logvar_ref, atol=1e-5, rtol=1e-5)

    print("KERNEL_OK")
</pallas_src>

<mosaic_0001>
module attributes {stable_mosaic.version = 11 : i64} {
  func.func @ucvme_kernel(%arg0: i32, %arg1: memref<8x16xf32, #tpu.memory_space<vmem>>, %arg2: memref<16x32xf32, #tpu.memory_space<vmem>>, %arg3: memref<1x32xf32, #tpu.memory_space<vmem>>, %arg4: memref<32x32xf32, #tpu.memory_space<vmem>>, %arg5: memref<1x32xf32, #tpu.memory_space<vmem>>, %arg6: memref<32x128xf32, #tpu.memory_space<vmem>>, %arg7: memref<1x128xf32, #tpu.memory_space<vmem>>, %arg8: memref<8x128xf32, #tpu.memory_space<vmem>>) attributes {dimension_semantics = [#tpu.dimension_semantics<parallel>], iteration_bounds = array<i64: 1>, scalar_prefetch = 0 : i64, scratch_operands = 0 : i64, tpu.core_type = #tpu.core_type<tc>, window_params = [{transform_indices = @transform_0, window_bounds = array<i64: 8, 16>}, {pipeline_mode = #tpu.pipeline_mode<synchronous>, transform_indices = @transform_1, window_bounds = array<i64: 16, 32>}, {pipeline_mode = #tpu.pipeline_mode<synchronous>, transform_indices = @transform_2, window_bounds = array<i64: 1, 32>}, {pipeline_mode = #tpu.pipeline_mode<synchronous>, transform_indices = @transform_3, window_bounds = array<i64: 32, 32>}, {pipeline_mode = #tpu.pipeline_mode<synchronous>, transform_indices = @transform_4, window_bounds = array<i64: 1, 32>}, {pipeline_mode = #tpu.pipeline_mode<synchronous>, transform_indices = @transform_5, window_bounds = array<i64: 32, 128>}, {pipeline_mode = #tpu.pipeline_mode<synchronous>, transform_indices = @transform_6, window_bounds = array<i64: 1, 128>}, {transform_indices = @transform_7, window_bounds = array<i64: 8, 128>}]} {
    %c0 = arith.constant 0 : index
    %c0_0 = arith.constant 0 : index
    %0 = vector.load %arg1[%c0, %c0_0] : memref<8x16xf32, #tpu.memory_space<vmem>>, vector<8x16xf32>
    %c0_1 = arith.constant 0 : index
    %c0_2 = arith.constant 0 : index
    %1 = vector.load %arg2[%c0_1, %c0_2] : memref<16x32xf32, #tpu.memory_space<vmem>>, vector<16x32xf32>
    %cst = arith.constant dense<0.000000e+00> : vector<8x32xf32>
    %2 = tpu.matmul %0, %1, %cst {dimension_numbers = #tpu.dot_dimension_numbers<[1], [0], [0], [1], [0, 0, 1, 1], [], []>} : vector<8x16xf32>, vector<16x32xf32>, vector<8x32xf32> -> vector<8x32xf32>
    %c0_3 = arith.constant 0 : index
    %c0_4 = arith.constant 0 : index
    %3 = vector.load %arg3[%c0_3, %c0_4] : memref<1x32xf32, #tpu.memory_space<vmem>>, vector<1x32xf32>
    %4 = vector.broadcast %3 : vector<1x32xf32> to vector<8x32xf32>
    %5 = arith.addf %2, %4 : vector<8x32xf32>
    %cst_5 = arith.constant 0.000000e+00 : f32
    %6 = vector.broadcast %cst_5 : f32 to vector<8x32xf32>
    %7 = arith.maximumf %5, %6 : vector<8x32xf32>
    %c0_6 = arith.constant 0 : index
    %c0_7 = arith.constant 0 : index
    %8 = vector.load %arg4[%c0_6, %c0_7] : memref<32x32xf32, #tpu.memory_space<vmem>>, vector<32x32xf32>
    %cst_8 = arith.constant dense<0.000000e+00> : vector<8x32xf32>
    %9 = tpu.matmul %7, %8, %cst_8 {dimension_numbers = #tpu.dot_dimension_numbers<[1], [0], [0], [1], [0, 0, 1, 1], [], []>} : vector<8x32xf32>, vector<32x32xf32>, vector<8x32xf32> -> vector<8x32xf32>
    %c0_9 = arith.constant 0 : index
    %c0_10 = arith.constant 0 : index
    %10 = vector.load %arg5[%c0_9, %c0_10] : memref<1x32xf32, #tpu.memory_space<vmem>>, vector<1x32xf32>
    %11 = vector.broadcast %10 : vector<1x32xf32> to vector<8x32xf32>
    %12 = arith.addf %9, %11 : vector<8x32xf32>
    %cst_11 = arith.constant 0.000000e+00 : f32
    %13 = vector.broadcast %cst_11 : f32 to vector<8x32xf32>
    %14 = arith.maximumf %12, %13 : vector<8x32xf32>
    %c0_12 = arith.constant 0 : index
    %c0_13 = arith.constant 0 : index
    %15 = vector.load %arg6[%c0_12, %c0_13] : memref<32x128xf32, #tpu.memory_space<vmem>>, vector<32x128xf32>
    %cst_14 = arith.constant dense<0.000000e+00> : vector<8x128xf32>
    %16 = tpu.matmul %14, %15, %cst_14 {dimension_numbers = #tpu.dot_dimension_numbers<[1], [0], [0], [1], [0, 0, 1, 1], [], []>} : vector<8x32xf32>, vector<32x128xf32>, vector<8x128xf32> -> vector<8x128xf32>
    %c0_15 = arith.constant 0 : index
    %c0_16 = arith.constant 0 : index
    %17 = vector.load %arg7[%c0_15, %c0_16] : memref<1x128xf32, #tpu.memory_space<vmem>>, vector<1x128xf32>
    %18 = vector.broadcast %17 : vector<1x128xf32> to vector<8x128xf32>
    %19 = arith.addf %16, %18 : vector<8x128xf32>
    %c0_17 = arith.constant 0 : index
    %c0_18 = arith.constant 0 : index
    %20 = vector.load %arg8[%c0_17, %c0_18] : memref<8x128xf32, #tpu.memory_space<vmem>>, vector<8x128xf32>
    tpu.vector_store %arg8[%c0_17, %c0_18], %19 {strides = array<i32>} : memref<8x128xf32, #tpu.memory_space<vmem>>, vector<8x128xf32>,
    return
  }
  func.func @transform_0(%arg0: i32) -> (i32, i32) {
    %c0_i32 = arith.constant 0 : i32
    %c0_i32_0 = arith.constant 0 : i32
    return %arg0, %c0_i32 : i32, i32
  }
  func.func @transform_1(%arg0: i32) -> (i32, i32) {
    %c0_i32 = arith.constant 0 : i32
    %c0_i32_0 = arith.constant 0 : i32
    %c0_i32_1 = arith.constant 0 : i32
    return %c0_i32, %c0_i32_0 : i32, i32
  }
  func.func @transform_2(%arg0: i32) -> (i32, i32) {
    %c0_i32 = arith.constant 0 : i32
    %c0_i32_0 = arith.constant 0 : i32
    %c0_i32_1 = arith.constant 0 : i32
    return %c0_i32, %c0_i32_0 : i32, i32
  }
  func.func @transform_3(%arg0: i32) -> (i32, i32) {
    %c0_i32 = arith.constant 0 : i32
    %c0_i32_0 = arith.constant 0 : i32
    %c0_i32_1 = arith.constant 0 : i32
    return %c0_i32, %c0_i32_0 : i32, i32
  }
  func.func @transform_4(%arg0: i32) -> (i32, i32) {
    %c0_i32 = arith.constant 0 : i32
    %c0_i32_0 = arith.constant 0 : i32
    %c0_i32_1 = arith.constant 0 : i32
    return %c0_i32, %c0_i32_0 : i32, i32
  }
  func.func @transform_5(%arg0: i32) -> (i32, i32) {
    %c0_i32 = arith.constant 0 : i32
    %c0_i32_0 = arith.constant 0 : i32
    %c0_i32_1 = arith.constant 0 : i32
    return %c0_i32, %c0_i32_0 : i32, i32
  }
  func.func @transform_6(%arg0: i32) -> (i32, i32) {
    %c0_i32 = arith.constant 0 : i32
    %c0_i32_0 = arith.constant 0 : i32
    %c0_i32_1 = arith.constant 0 : i32
    return %c0_i32, %c0_i32_0 : i32, i32
  }
  func.func @transform_7(%arg0: i32) -> (i32, i32) {
    %c0_i32 = arith.constant 0 : i32
    %c0_i32_0 = arith.constant 0 : i32
    return %arg0, %c0_i32 : i32, i32
  }
}

module attributes {stable_mosaic.version = 11 : i64} {
  func.func @ucvme_kernel(%arg0: i32, %arg1: memref<8x16xf32, #tpu.memory_space<vmem>>, %arg2: memref<16x32xf32, #tpu.memory_space<vmem>>, %arg3: memref<1x32xf32, #tpu.memory_space<vmem>>, %arg4: memref<32x32xf32, #tpu.memory_space<vmem>>, %arg5: memref<1x32xf32, #tpu.memory_space<vmem>>, %arg6: memref<32x128xf32, #tpu.memory_space<vmem>>, %arg7: memref<1x128xf32, #tpu.memory_space<vmem>>, %arg8: memref<8x128xf32, #tpu.memory_space<vmem>>) attributes {dimension_semantics = [#tpu.dimension_semantics<parallel>], iteration_bounds = array<i64: 1>, scalar_prefetch = 0 : i64, scratch_operands = 0 : i64, tpu.core_type = #tpu.core_type<tc>, window_params = [{transform_indices = @transform_0, window_bounds = array<i64: 8, 16>}, {pipeline_mode = #tpu.pipeline_mode<synchronous>, transform_indices = @transform_1, window_bounds = array<i64: 16, 32>}, {pipeline_mode = #tpu.pipeline_mode<synchronous>, transform_indices = @transform_2, window_bounds = array<i64: 1, 32>}, {pipeline_mode = #tpu.pipeline_mode<synchronous>, transform_indices = @transform_3, window_bounds = array<i64: 32, 32>}, {pipeline_mode = #tpu.pipeline_mode<synchronous>, transform_indices = @transform_4, window_bounds = array<i64: 1, 32>}, {pipeline_mode = #tpu.pipeline_mode<synchronous>, transform_indices = @transform_5, window_bounds = array<i64: 32, 128>}, {pipeline_mode = #tpu.pipeline_mode<synchronous>, transform_indices = @transform_6, window_bounds = array<i64: 1, 128>}, {transform_indices = @transform_7, window_bounds = array<i64: 8, 128>}]} {
    %c0 = arith.constant 0 : index
    %c0_0 = arith.constant 0 : index
    %0 = vector.load %arg1[%c0, %c0_0] : memref<8x16xf32, #tpu.memory_space<vmem>>, vector<8x16xf32>
    %c0_1 = arith.constant 0 : index
    %c0_2 = arith.constant 0 : index
    %1 = vector.load %arg2[%c0_1, %c0_2] : memref<16x32xf32, #tpu.memory_space<vmem>>, vector<16x32xf32>
    %cst = arith.constant dense<0.000000e+00> : vector<8x32xf32>
    %2 = tpu.matmul %0, %1, %cst {dimension_numbers = #tpu.dot_dimension_numbers<[1], [0], [0], [1], [0, 0, 1, 1], [], []>} : vector<8x16xf32>, vector<16x32xf32>, vector<8x32xf32> -> vector<8x32xf32>
    %c0_3 = arith.constant 0 : index
    %c0_4 = arith.constant 0 : index
    %3 = vector.load %arg3[%c0_3, %c0_4] : memref<1x32xf32, #tpu.memory_space<vmem>>, vector<1x32xf32>
    %4 = vector.broadcast %3 : vector<1x32xf32> to vector<8x32xf32>
    %5 = arith.addf %2, %4 : vector<8x32xf32>
    %cst_5 = arith.constant 0.000000e+00 : f32
    %6 = vector.broadcast %cst_5 : f32 to vector<8x32xf32>
    %7 = arith.maximumf %5, %6 : vector<8x32xf32>
    %c0_6 = arith.constant 0 : index
    %c0_7 = arith.constant 0 : index
    %8 = vector.load %arg4[%c0_6, %c0_7] : memref<32x32xf32, #tpu.memory_space<vmem>>, vector<32x32xf32>
    %cst_8 = arith.constant dense<0.000000e+00> : vector<8x32xf32>
    %9 = tpu.matmul %7, %8, %cst_8 {dimension_numbers = #tpu.dot_dimension_numbers<[1], [0], [0], [1], [0, 0, 1, 1], [], []>} : vector<8x32xf32>, vector<32x32xf32>, vector<8x32xf32> -> vector<8x32xf32>
    %c0_9 = arith.constant 0 : index
    %c0_10 = arith.constant 0 : index
    %10 = vector.load %arg5[%c0_9, %c0_10] : memref<1x32xf32, #tpu.memory_space<vmem>>, vector<1x32xf32>
    %11 = vector.broadcast %10 : vector<1x32xf32> to vector<8x32xf32>
    %12 = arith.addf %9, %11 : vector<8x32xf32>
    %cst_11 = arith.constant 0.000000e+00 : f32
    %13 = vector.broadcast %cst_11 : f32 to vector<8x32xf32>
    %14 = arith.maximumf %12, %13 : vector<8x32xf32>
    %c0_12 = arith.constant 0 : index
    %c0_13 = arith.constant 0 : index
    %15 = vector.load %arg6[%c0_12, %c0_13] : memref<32x128xf32, #tpu.memory_space<vmem>>, vector<32x128xf32>
    %cst_14 = arith.constant dense<0.000000e+00> : vector<8x128xf32>
    %16 = tpu.matmul %14, %15, %cst_14 {dimension_numbers = #tpu.dot_dimension_numbers<[1], [0], [0], [1], [0, 0, 1, 1], [], []>} : vector<8x32xf32>, vector<32x128xf32>, vector<8x128xf32> -> vector<8x128xf32>
    %c0_15 = arith.constant 0 : index
    %c0_16 = arith.constant 0 : index
    %17 = vector.load %arg7[%c0_15, %c0_16] : memref<1x128xf32, #tpu.memory_space<vmem>>, vector<1x128xf32>
    %18 = vector.broadcast %17 : vector<1x128xf32> to vector<8x128xf32>
    %19 = arith.addf %16, %18 : vector<8x128xf32>
    %c0_17 = arith.constant 0 : index
    %c0_18 = arith.constant 0 : index
    %20 = vector.load %arg8[%c0_17, %c0_18] : memref<8x128xf32, #tpu.memory_space<vmem>>, vector<8x128xf32>
    tpu.vector_store %arg8[%c0_17, %c0_18], %19 {strides = array<i32>} : memref<8x128xf32, #tpu.memory_space<vmem>>, vector<8x128xf32>,
    return
  }
  func.func @transform_0(%arg0: i32) -> (i32, i32) {
    %c0_i32 = arith.constant 0 : i32
    %c0_i32_0 = arith.constant 0 : i32
    return %arg0, %c0_i32 : i32, i32
  }
  func.func @transform_1(%arg0: i32) -> (i32, i32) {
    %c0_i32 = arith.constant 0 : i32
    %c0_i32_0 = arith.constant 0 : i32
    %c0_i32_1 = arith.constant 0 : i32
    return %c0_i32, %c0_i32_0 : i32, i32
  }
  func.func @transform_2(%arg0: i32) -> (i32, i32) {
    %c0_i32 = arith.constant 0 : i32
    %c0_i32_0 = arith.constant 0 : i32
    %c0_i32_1 = arith.constant 0 : i32
    return %c0_i32, %c0_i32_0 : i32, i32
  }
  func.func @transform_3(%arg0: i32) -> (i32, i32) {
    %c0_i32 = arith.constant 0 : i32
    %c0_i32_0 = arith.constant 0 : i32
    %c0_i32_1 = arith.constant 0 : i32
    return %c0_i32, %c0_i32_0 : i32, i32
  }
  func.func @transform_4(%arg0: i32) -> (i32, i32) {
    %c0_i32 = arith.constant 0 : i32
    %c0_i32_0 = arith.constant 0 : i32
    %c0_i32_1 = arith.constant 0 : i32
    return %c0_i32, %c0_i32_0 : i32, i32
  }
  func.func @transform_5(%arg0: i32) -> (i32, i32) {
    %c0_i32 = arith.constant 0 : i32
    %c0_i32_0 = arith.constant 0 : i32
    %c0_i32_1 = arith.constant 0 : i32
    return %c0_i32, %c0_i32_0 : i32, i32
  }
  func.func @transform_6(%arg0: i32) -> (i32, i32) {
    %c0_i32 = arith.constant 0 : i32
    %c0_i32_0 = arith.constant 0 : i32
    %c0_i32_1 = arith.constant 0 : i32
    return %c0_i32, %c0_i32_0 : i32, i32
  }
  func.func @transform_7(%arg0: i32) -> (i32, i32) {
    %c0_i32 = arith.constant 0 : i32
    %c0_i32_0 = arith.constant 0 : i32
    return %arg0, %c0_i32 : i32, i32
  }
}

</mosaic_0001>

<llo_original>
// kernel: _ucvme_forward_impl.1
$region0: #{_ucvme_forward_impl.1}
  #allocation0 [shape = 'u32[]', space=smem, size = 0x4, offset = 0x4, fixed_abs, tag = 'smem constant byte address 0x4 - core index']
  #allocation1 [shape = 'u32[144,128]{1,0:T(1,128)}', space=vmem, size = 0x12000, scoped, tag = 'internal scratch']
  %s0 = inlined_call_operand.hbm [shape: f32[8,16], index: 0, kind: input, shape index: {}]
  %s1 = inlined_call_operand.hbm [shape: f32[16,32], index: 1, kind: input, shape index: {}]
  %s2 = inlined_call_operand.vmem [shape: f32[1,32], index: 2, kind: input, shape index: {}]
  %s3 = inlined_call_operand.hbm [shape: f32[32,32], index: 3, kind: input, shape index: {}]
  %s4 = inlined_call_operand.vmem [shape: f32[1,32], index: 4, kind: input, shape index: {}]
  %s5 = inlined_call_operand.hbm [shape: f32[32,128], index: 5, kind: input, shape index: {}]
  %s6 = inlined_call_operand.vmem [shape: f32[1,128], index: 6, kind: input, shape index: {}]
  %s7 = inlined_call_operand.vmem [shape: f32[8,128], index: 7, kind: output, shape index: {}]
  %s8 = sld [smem:[#allocation0]]
  $region54: #{_ucvme_forward_impl.1} parent=0
    _
  %s10 = ssub.s32 1, %s8
  %s11 = scalar_select 0, %s10, %s8
  $region1: #{_ucvme_forward_impl.1} parent=0
    #allocation2 [shape = 'u8[4096]{0}', space=vmem, size = 0x1000, scoped, tag = 'input window, operand 0, single buffered']
    #allocation3 [shape = 's32[1]{0}', space=sflag, size = 0x4, scoped, tag = 'scoped memory for _ucvme_forward_impl.1']
    #allocation4 [shape = 'u8[8192]{0}', space=vmem, size = 0x2000, scoped, tag = 'input window, operand 1, single buffered']
    #allocation5 [shape = 's32[1]{0}', space=sflag, size = 0x4, scoped, tag = 'scoped memory for _ucvme_forward_impl.1']
    #allocation6 [shape = 'u8[16384]{0}', space=vmem, size = 0x4000, scoped, tag = 'input window, operand 3, single buffered']
    #allocation7 [shape = 'u8[16384]{0}', space=vmem, size = 0x4000, scoped, tag = 'input window, operand 5, single buffered']
    #allocation8 [shape = 's32[1]{0}', space=sflag, size = 0x4, scoped, tag = 'scoped memory for _ucvme_forward_impl.1']
    %12 = vsyncpa [#allocation3], 0
    %13 = vsyncpa [#allocation5], 0
    %14 = vsyncpa [#allocation8], 0
    // Predicated region
    $region2: #{_ucvme_forward_impl.1} parent=1 // pred_check
      _
    $region3: #{_ucvme_forward_impl.1} parent=1 // pred_check_branch
      %16 = sbr.rel (0) target = $region5
    $region4: #{_ucvme_forward_impl.1} parent=1 // pred_region
      %s18 = ssub.s32 128, 128
      %19 = vsyncadd [#allocation3], %s18
      %s21 = sshll.u32 [#allocation2], 4
      %s22 = int_to_ptr.vmem [resolvable:$true] %s21
      %24 = dma.hbm_to_vmem [thread:$0]  %s0, 128, %s22, [#allocation3]
    $region5: #{_ucvme_forward_impl.1} parent=1 // pred_fallthru
      _
    // Predicated region
    $region6: #{_ucvme_forward_impl.1} parent=1 // pred_check
      _
    $region7: #{_ucvme_forward_impl.1} parent=1 // pred_check_branch
      %26 = sbr.rel (0) target = $region9
    $region8: #{_ucvme_forward_impl.1} parent=1 // pred_region
      %s28 = ssub.s32 256, 256
      %29 = vsyncadd [#allocation5], %s28
      %s30 = sshll.u32 [#allocation4], 4
      %s31 = int_to_ptr.vmem [resolvable:$true] %s30
      %36 = dma.hbm_to_vmem [thread:$0]  %s1, 256, %s31, [#allocation5], 128, 128, 8
    $region9: #{_ucvme_forward_impl.1} parent=1 // pred_fallthru
      _
    // Predicated region
    $region10: #{_ucvme_forward_impl.1} parent=1 // pred_check
      _
    $region11: #{_ucvme_forward_impl.1} parent=1 // pred_check_branch
      %38 = sbr.rel (0) target = $region13
    $region12: #{_ucvme_forward_impl.1} parent=1 // pred_region
      _
    $region13: #{_ucvme_forward_impl.1} parent=1 // pred_fallthru
      _
    // Predicated region
    $region14: #{_ucvme_forward_impl.1} parent=1 // pred_check
      _
    $region15: #{_ucvme_forward_impl.1} parent=1 // pred_check_branch
      %40 = sbr.rel (0) target = $region17
    $region16: #{_ucvme_forward_impl.1} parent=1 // pred_region
      %s42 = ssub.s32 512, 512
      %43 = vsyncadd [#allocation5], %s42
      %s44 = sshll.u32 [#allocation6], 4
      %s45 = int_to_ptr.vmem [resolvable:$true] %s44
      %50 = dma.hbm_to_vmem [thread:$0]  %s3, 512, %s45, [#allocation5], 128, 128, 8
    $region17: #{_ucvme_forward_impl.1} parent=1 // pred_fallthru
      _
    // Predicated region
    $region18: #{_ucvme_forward_impl.1} parent=1 // pred_check
      _
    $region19: #{_ucvme_forward_impl.1} parent=1 // pred_check_branch
      %52 = sbr.rel (0) target = $region21
    $region20: #{_ucvme_forward_impl.1} parent=1 // pred_region
      _
    $region21: #{_ucvme_forward_impl.1} parent=1 // pred_fallthru
      _
    // Predicated region
    $region22: #{_ucvme_forward_impl.1} parent=1 // pred_check
      _
    $region23: #{_ucvme_forward_impl.1} parent=1 // pred_check_branch
      %54 = sbr.rel (0) target = $region25
    $region24: #{_ucvme_forward_impl.1} parent=1 // pred_region
      %s56 = ssub.s32 512, 512
      %57 = vsyncadd [#allocation8], %s56
      %s58 = sshll.u32 [#allocation7], 4
      %s59 = int_to_ptr.vmem [resolvable:$true] %s58
      %64 = dma.hbm_to_vmem [thread:$0]  %s5, 512, %s59, [#allocation8], 128, 128, 8
    $region25: #{_ucvme_forward_impl.1} parent=1 // pred_fallthru
      _
    // Predicated region
    $region26: #{_ucvme_forward_impl.1} parent=1 // pred_check
      _
    $region27: #{_ucvme_forward_impl.1} parent=1 // pred_check_branch
      %66 = sbr.rel (0) target = $region29
    $region28: #{_ucvme_forward_impl.1} parent=1 // pred_region
      _
    $region29: #{_ucvme_forward_impl.1} parent=1 // pred_fallthru
      _
    // Predicated region
    $region30: #{_ucvme_forward_impl.1} parent=1 // pred_check
      _
    $region31: #{_ucvme_forward_impl.1} parent=1 // pred_check_branch
      %68 = sbr.rel (0) target = $region33
    $region32: #{_ucvme_forward_impl.1} parent=1 // pred_region
      %69 = dma.done [#allocation3], 128
    $region33: #{_ucvme_forward_impl.1} parent=1 // pred_fallthru
      _
    // Predicated region
    $region34: #{_ucvme_forward_impl.1} parent=1 // pred_check
      _
    $region35: #{_ucvme_forward_impl.1} parent=1 // pred_check_branch
      %71 = sbr.rel (0) target = $region37
    $region36: #{_ucvme_forward_impl.1} parent=1 // pred_region
      %72 = dma.done [#allocation5], 256
    $region37: #{_ucvme_forward_impl.1} parent=1 // pred_fallthru
      _
    // Predicated region
    $region38: #{_ucvme_forward_impl.1} parent=1 // pred_check
      _
    $region39: #{_ucvme_forward_impl.1} parent=1 // pred_check_branch
      %74 = sbr.rel (0) target = $region41
    $region40: #{_ucvme_forward_impl.1} parent=1 // pred_region
      %75 = dma.done [#allocation5], 512
    $region41: #{_ucvme_forward_impl.1} parent=1 // pred_fallthru
      _
    // Predicated region
    $region42: #{_ucvme_forward_impl.1} parent=1 // pred_check
      _
    $region43: #{_ucvme_forward_impl.1} parent=1 // pred_check_branch
      %77 = sbr.rel (0) target = $region45
    $region44: #{_ucvme_forward_impl.1} parent=1 // pred_region
      %78 = dma.done [#allocation8], 512
    $region45: #{_ucvme_forward_impl.1} parent=1 // pred_fallthru
      _
    %v79 = vld [vmem:[#allocation2] sm:$0xff]
    %v80 = vld [vmem:[#allocation4] sm:$0xff]
    %v81 = vld [vmem:[#allocation4 + $0x8] sm:$0xff]
    %v82 = vld [vmem:[%s2] sm:$0x1]
    %v84 = vlaneseq
    %v85 = vshrl.u32 %v84, 7
    %v86 = vsub.s32 0, %v85
    %v87 = vrot.slane %v82, %v86
    %vm89 = vcmask 130048
    %v91 = vsel %vm89, %v79, 0
    %93 = vmatprep.subr.mxu0 0.0
    %94 = vmatpush1.msra.mxu0 %v80
    %95 = vmatprep.subr.mxu0 0.0
    %96 = vmatpush1.msra.mxu0 %v81
    %97 = vmatprep.subr.mxu0 0.0
    %98 = vmatpush1.msra.mxu0 0.0
    %99 = vmatprep.subr.mxu0 0.0
    %100 = vmatpush1.msra.mxu0 0.0
    %101 = vmatprep.subr.mxu0 0.0
    %102 = vmatpush1.msra.mxu0 0.0
    %103 = vmatprep.subr.mxu0 0.0
    %104 = vmatpush1.msra.mxu0 0.0
    %105 = vmatprep.subr.mxu0 0.0
    %106 = vmatpush1.msra.mxu0 0.0
    %107 = vmatprep.subr.mxu0 0.0
    %108 = vmatpush1.msra.mxu0 0.0
    %109 = vmatprep.subr.mxu0 0.0
    %110 = vmatpush1.msra.mxu0 0.0
    %111 = vmatprep.subr.mxu0 0.0
    %112 = vmatpush1.msra.mxu0 0.0
    %113 = vmatprep.subr.mxu0 0.0
    %114 = vmatpush1.msra.mxu0 0.0
    %115 = vmatprep.subr.mxu0 0.0
    %116 = vmatpush1.msra.mxu0 0.0
    %117 = vmatprep.subr.mxu0 0.0
    %118 = vmatpush1.msra.mxu0 0.0
    %119 = vmatprep.subr.mxu0 0.0
    %120 = vmatpush1.msra.mxu0 0.0
    %121 = vmatprep.subr.mxu0 0.0
    %122 = vmatpush1.msra.mxu0 0.0
    %123 = vmatprep.subr.mxu0 0.0
    %124 = vmatpush1.msra.mxu0 0.0
    %125 = vmatprep.subr.mxu0 0.0
    %126 = vmatpush1.msra.mxu0 0.0
    %127 = vmatprep.subr.mxu0 0.0
    %128 = vmatpush1.msra.mxu0 0.0
    %129 = vmatprep.subr.mxu0 0.0
    %130 = vmatpush1.msra.mxu0 0.0
    %131 = vmatprep.subr.mxu0 0.0
    %132 = vmatpush1.msra.mxu0 0.0
    %133 = vmatprep.subr.mxu0 0.0
    %134 = vmatpush1.msra.mxu0 0.0
    %135 = vmatprep.subr.mxu0 0.0
    %136 = vmatpush1.msra.mxu0 0.0
    %137 = vmatprep.subr.mxu0 0.0
    %138 = vmatpush1.msra.mxu0 0.0
    %139 = vmatprep.subr.mxu0 0.0
    %140 = vmatpush1.msra.mxu0 0.0
    %141 = vmatprep.subr.mxu0 0.0
    %142 = vmatpush1.msra.mxu0 0.0
    %143 = vmatprep.subr.mxu0 0.0
    %144 = vmatpush1.msra.mxu0 0.0
    %145 = vmatprep.subr.mxu0 0.0
    %146 = vmatpush1.msra.mxu0 0.0
    %147 = vmatprep.subr.mxu0 0.0
    %148 = vmatpush1.msra.mxu0 0.0
    %149 = vmatprep.subr.mxu0 0.0
    %150 = vmatpush1.msra.mxu0 0.0
    %151 = vmatprep.subr.mxu0 0.0
    %152 = vmatpush1.msra.mxu0 0.0
    %153 = vmatprep.subr.mxu0 0.0
    %154 = vmatpush1.msra.mxu0 0.0
    %155 = vmatprep.subr.mxu0 0.0
    %156 = vmatpush1.msra.mxu0 0.0
    %157 = vmatprep.mubr.f32.mxu0 0.0
    %158 = vmatmul.mubr.f32.gmra.mrb[0].mxu0 %v91
    %v159 = vpop.f32.mrb[0].mxu0
    %v160 = vadd.f32 %v87, %v159
    %v161 = vpop.f32.mrb[0].mxu0
    %162 = vdwg.mxu0
    %v163 = vmax.f32 %v160, 0.0
    %v164 = vld [vmem:[#allocation6] sm:$0xff]
    %v165 = vld [vmem:[#allocation6 + $0x8] sm:$0xff]
    %v166 = vld [vmem:[#allocation6 + $0x10] sm:$0xff]
    %v167 = vld [vmem:[#allocation6 + $0x18] sm:$0xff]
    %v168 = vld [vmem:[%s4] sm:$0x1]
    %v170 = vlaneseq
    %v171 = vshrl.u32 %v170, 7
    %v172 = vsub.s32 0, %v171
    %v173 = vrot.slane %v168, %v172
    %vm175 = vcmask 261120
    %v177 = vsel %vm175, %v163, 0
    %179 = vmatprep.subr.mxu0 0.0
    %180 = vmatpush1.msra.mxu0 %v164
    %181 = vmatprep.subr.mxu0 0.0
    %182 = vmatpush1.msra.mxu0 %v165
    %183 = vmatprep.subr.mxu0 0.0
    %184 = vmatpush1.msra.mxu0 %v166
    %185 = vmatprep.subr.mxu0 0.0
    %186 = vmatpush1.msra.mxu0 %v167
    %187 = vmatprep.subr.mxu0 0.0
    %188 = vmatpush1.msra.mxu0 0.0
    %189 = vmatprep.subr.mxu0 0.0
    %190 = vmatpush1.msra.mxu0 0.0
    %191 = vmatprep.subr.mxu0 0.0
    %192 = vmatpush1.msra.mxu0 0.0
    %193 = vmatprep.subr.mxu0 0.0
    %194 = vmatpush1.msra.mxu0 0.0
    %195 = vmatprep.subr.mxu0 0.0
    %196 = vmatpush1.msra.mxu0 0.0
    %197 = vmatprep.subr.mxu0 0.0
    %198 = vmatpush1.msra.mxu0 0.0
    %199 = vmatprep.subr.mxu0 0.0
    %200 = vmatpush1.msra.mxu0 0.0
    %201 = vmatprep.subr.mxu0 0.0
    %202 = vmatpush1.msra.mxu0 0.0
    %203 = vmatprep.subr.mxu0 0.0
    %204 = vmatpush1.msra.mxu0 0.0
    %205 = vmatprep.subr.mxu0 0.0
    %206 = vmatpush1.msra.mxu0 0.0
    %207 = vmatprep.subr.mxu0 0.0
    %208 = vmatpush1.msra.mxu0 0.0
    %209 = vmatprep.subr.mxu0 0.0
    %210 = vmatpush1.msra.mxu0 0.0
    %211 = vmatprep.subr.mxu0 0.0
    %212 = vmatpush1.msra.mxu0 0.0
    %213 = vmatprep.subr.mxu0 0.0
    %214 = vmatpush1.msra.mxu0 0.0
    %215 = vmatprep.subr.mxu0 0.0
    %216 = vmatpush1.msra.mxu0 0.0
    %217 = vmatprep.subr.mxu0 0.0
    %218 = vmatpush1.msra.mxu0 0.0
    %219 = vmatprep.subr.mxu0 0.0
    %220 = vmatpush1.msra.mxu0 0.0
    %221 = vmatprep.subr.mxu0 0.0
    %222 = vmatpush1.msra.mxu0 0.0
    %223 = vmatprep.subr.mxu0 0.0
    %224 = vmatpush1.msra.mxu0 0.0
    %225 = vmatprep.subr.mxu0 0.0
    %226 = vmatpush1.msra.mxu0 0.0
    %227 = vmatprep.subr.mxu0 0.0
    %228 = vmatpush1.msra.mxu0 0.0
    %229 = vmatprep.subr.mxu0 0.0
    %230 = vmatpush1.msra.mxu0 0.0
    %231 = vmatprep.subr.mxu0 0.0
    %232 = vmatpush1.msra.mxu0 0.0
    %233 = vmatprep.subr.mxu0 0.0
    %234 = vmatpush1.msra.mxu0 0.0
    %235 = vmatprep.subr.mxu0 0.0
    %236 = vmatpush1.msra.mxu0 0.0
    %237 = vmatprep.subr.mxu0 0.0
    %238 = vmatpush1.msra.mxu0 0.0
    %239 = vmatprep.subr.mxu0 0.0
    %240 = vmatpush1.msra.mxu0 0.0
    %241 = vmatprep.subr.mxu0 0.0
    %242 = vmatpush1.msra.mxu0 0.0
    %243 = vmatprep.mubr.f32.mxu0 0.0
    %244 = vmatmul.mubr.f32.gmra.mrb[0].mxu0 %v177
    %v245 = vpop.f32.mrb[0].mxu0
    %v246 = vadd.f32 %v173, %v245
    %v247 = vpop.f32.mrb[0].mxu0
    %248 = vdwg.mxu0
    %v249 = vmax.f32 %v246, 0.0
    %v250 = vld [vmem:[#allocation7] sm:$0xff]
    %v251 = vld [vmem:[#allocation7 + $0x8] sm:$0xff]
    %v252 = vld [vmem:[#allocation7 + $0x10] sm:$0xff]
    %v253 = vld [vmem:[#allocation7 + $0x18] sm:$0xff]
    %v254 = vld [vmem:[%s6] sm:$0x1]
    %v256 = vlaneseq
    %v257 = vshrl.u32 %v256, 7
    %v258 = vsub.s32 0, %v257
    %v259 = vrot.slane %v254, %v258
    %v262 = vsel %vm175, %v249, 0
    %264 = vmatprep.subr.mxu0 0.0
    %265 = vmatpush1.msra.mxu0 %v250
    %266 = vmatprep.subr.mxu0 0.0
    %267 = vmatpush1.msra.mxu0 %v251
    %268 = vmatprep.subr.mxu0 0.0
    %269 = vmatpush1.msra.mxu0 %v252
    %270 = vmatprep.subr.mxu0 0.0
    %271 = vmatpush1.msra.mxu0 %v253
    %272 = vmatprep.subr.mxu0 0.0
    %273 = vmatpush1.msra.mxu0 0.0
    %274 = vmatprep.subr.mxu0 0.0
    %275 = vmatpush1.msra.mxu0 0.0
    %276 = vmatprep.subr.mxu0 0.0
    %277 = vmatpush1.msra.mxu0 0.0
    %278 = vmatprep.subr.mxu0 0.0
    %279 = vmatpush1.msra.mxu0 0.0
    %280 = vmatprep.subr.mxu0 0.0
    %281 = vmatpush1.msra.mxu0 0.0
    %282 = vmatprep.subr.mxu0 0.0
    %283 = vmatpush1.msra.mxu0 0.0
    %284 = vmatprep.subr.mxu0 0.0
    %285 = vmatpush1.msra.mxu0 0.0
    %286 = vmatprep.subr.mxu0 0.0
    %287 = vmatpush1.msra.mxu0 0.0
    %288 = vmatprep.subr.mxu0 0.0
    %289 = vmatpush1.msra.mxu0 0.0
    %290 = vmatprep.subr.mxu0 0.0
    %291 = vmatpush1.msra.mxu0 0.0
    %292 = vmatprep.subr.mxu0 0.0
    %293 = vmatpush1.msra.mxu0 0.0
    %294 = vmatprep.subr.mxu0 0.0
    %295 = vmatpush1.msra.mxu0 0.0
    %296 = vmatprep.subr.mxu0 0.0
    %297 = vmatpush1.msra.mxu0 0.0
    %298 = vmatprep.subr.mxu0 0.0
    %299 = vmatpush1.msra.mxu0 0.0
    %300 = vmatprep.subr.mxu0 0.0
    %301 = vmatpush1.msra.mxu0 0.0
    %302 = vmatprep.subr.mxu0 0.0
    %303 = vmatpush1.msra.mxu0 0.0
    %304 = vmatprep.subr.mxu0 0.0
    %305 = vmatpush1.msra.mxu0 0.0
    %306 = vmatprep.subr.mxu0 0.0
    %307 = vmatpush1.msra.mxu0 0.0
    %308 = vmatprep.subr.mxu0 0.0
    %309 = vmatpush1.msra.mxu0 0.0
    %310 = vmatprep.subr.mxu0 0.0
    %311 = vmatpush1.msra.mxu0 0.0
    %312 = vmatprep.subr.mxu0 0.0
    %313 = vmatpush1.msra.mxu0 0.0
    %314 = vmatprep.subr.mxu0 0.0
    %315 = vmatpush1.msra.mxu0 0.0
    %316 = vmatprep.subr.mxu0 0.0
    %317 = vmatpush1.msra.mxu0 0.0
    %318 = vmatprep.subr.mxu0 0.0
    %319 = vmatpush1.msra.mxu0 0.0
    %320 = vmatprep.subr.mxu0 0.0
    %321 = vmatpush1.msra.mxu0 0.0
    %322 = vmatprep.subr.mxu0 0.0
    %323 = vmatpush1.msra.mxu0 0.0
    %324 = vmatprep.subr.mxu0 0.0
    %325 = vmatpush1.msra.mxu0 0.0
    %326 = vmatprep.subr.mxu0 0.0
    %327 = vmatpush1.msra.mxu0 0.0
    %328 = vmatprep.mubr.f32.mxu0 0.0
    %329 = vmatmul.mubr.f32.gmra.mrb[0].mxu0 %v262
    %v330 = vpop.f32.mrb[0].mxu0
    %v331 = vadd.f32 %v259, %v330
    %v332 = vpop.f32.mrb[0].mxu0
    %333 = vdwg.mxu0
    %334 = vst [vmem:[%s7] sm:$0xff] %v331
    // Predicated region
    $region46: #{_ucvme_forward_impl.1} parent=1 // pred_check
      _
    $region47: #{_ucvme_forward_impl.1} parent=1 // pred_check_branch
      %336 = sbr.rel (0) target = $region49
    $region48: #{_ucvme_forward_impl.1} parent=1 // pred_region
      _
    $region49: #{_ucvme_forward_impl.1} parent=1 // pred_fallthru
      _
    // Predicated region
    $region50: #{_ucvme_forward_impl.1} parent=1 // pred_check
      _
    $region51: #{_ucvme_forward_impl.1} parent=1 // pred_check_branch
      %338 = sbr.rel (0) target = $region53
    $region52: #{_ucvme_forward_impl.1} parent=1 // pred_region
      _
    $region53: #{_ucvme_forward_impl.1} parent=1 // pred_fallthru
      _
    %339 = vsyncpa [#allocation3], 1
    %340 = vsyncpa [#allocation5], 1
    %341 = vsyncpa [#allocation8], 1

// kernel: _ucvme_forward_impl.1
$region0: #{_ucvme_forward_impl.1}
  #allocation0 [shape = 'u32[]', space=smem, size = 0x4, offset = 0x4, fixed_abs, tag = 'smem constant byte address 0x4 - core index']
  #allocation1 [shape = 'u32[144,128]{1,0:T(1,128)}', space=vmem, size = 0x12000, scoped, tag = 'internal scratch']
  %s0 = inlined_call_operand.hbm [shape: f32[8,16], index: 0, kind: input, shape index: {}]
  %s1 = inlined_call_operand.hbm [shape: f32[16,32], index: 1, kind: input, shape index: {}]
  %s2 = inlined_call_operand.vmem [shape: f32[1,32], index: 2, kind: input, shape index: {}]
  %s3 = inlined_call_operand.hbm [shape: f32[32,32], index: 3, kind: input, shape index: {}]
  %s4 = inlined_call_operand.vmem [shape: f32[1,32], index: 4, kind: input, shape index: {}]
  %s5 = inlined_call_operand.hbm [shape: f32[32,128], index: 5, kind: input, shape index: {}]
  %s6 = inlined_call_operand.vmem [shape: f32[1,128], index: 6, kind: input, shape index: {}]
  %s7 = inlined_call_operand.vmem [shape: f32[8,128], index: 7, kind: output, shape index: {}]
  %s8 = sld [smem:[#allocation0]]
  $region54: #{_ucvme_forward_impl.1} parent=0
    _
  %s10 = ssub.s32 1, %s8
  %s11 = scalar_select 0, %s10, %s8
  $region1: #{_ucvme_forward_impl.1} parent=0
    #allocation2 [shape = 'u8[4096]{0}', space=vmem, size = 0x1000, scoped, tag = 'input window, operand 0, single buffered']
    #allocation3 [shape = 's32[1]{0}', space=sflag, size = 0x4, scoped, tag = 'scoped memory for _ucvme_forward_impl.1']
    #allocation4 [shape = 'u8[8192]{0}', space=vmem, size = 0x2000, scoped, tag = 'input window, operand 1, single buffered']
    #allocation5 [shape = 's32[1]{0}', space=sflag, size = 0x4, scoped, tag = 'scoped memory for _ucvme_forward_impl.1']
    #allocation6 [shape = 'u8[16384]{0}', space=vmem, size = 0x4000, scoped, tag = 'input window, operand 3, single buffered']
    #allocation7 [shape = 'u8[16384]{0}', space=vmem, size = 0x4000, scoped, tag = 'input window, operand 5, single buffered']
    #allocation8 [shape = 's32[1]{0}', space=sflag, size = 0x4, scoped, tag = 'scoped memory for _ucvme_forward_impl.1']
    %12 = vsyncpa [#allocation3], 0
    %13 = vsyncpa [#allocation5], 0
    %14 = vsyncpa [#allocation8], 0
    // Predicated region
    $region2: #{_ucvme_forward_impl.1} parent=1 // pred_check
      _
    $region3: #{_ucvme_forward_impl.1} parent=1 // pred_check_branch
      %16 = sbr.rel (0) target = $region5
    $region4: #{_ucvme_forward_impl.1} parent=1 // pred_region
      %s18 = ssub.s32 128, 128
      %19 = vsyncadd [#allocation3], %s18
      %s21 = sshll.u32 [#allocation2], 4
      %s22 = int_to_ptr.vmem [resolvable:$true] %s21
      %24 = dma.hbm_to_vmem [thread:$0]  %s0, 128, %s22, [#allocation3]
    $region5: #{_ucvme_forward_impl.1} parent=1 // pred_fallthru
      _
    // Predicated region
    $region6: #{_ucvme_forward_impl.1} parent=1 // pred_check
      _
    $region7: #{_ucvme_forward_impl.1} parent=1 // pred_check_branch
      %26 = sbr.rel (0) target = $region9
    $region8: #{_ucvme_forward_impl.1} parent=1 // pred_region
      %s28 = ssub.s32 256, 256
      %29 = vsyncadd [#allocation5], %s28
      %s30 = sshll.u32 [#allocation4], 4
      %s31 = int_to_ptr.vmem [resolvable:$true] %s30
      %36 = dma.hbm_to_vmem [thread:$0]  %s1, 256, %s31, [#allocation5], 128, 128, 8
    $region9: #{_ucvme_forward_impl.1} parent=1 // pred_fallthru
      _
    // Predicated region
    $region10: #{_ucvme_forward_impl.1} parent=1 // pred_check
      _
    $region11: #{_ucvme_forward_impl.1} parent=1 // pred_check_branch
      %38 = sbr.rel (0) target = $region13
    $region12: #{_ucvme_forward_impl.1} parent=1 // pred_region
      _
    $region13: #{_ucvme_forward_impl.1} parent=1 // pred_fallthru
      _
    // Predicated region
    $region14: #{_ucvme_forward_impl.1} parent=1 // pred_check
      _
    $region15: #{_ucvme_forward_impl.1} parent=1 // pred_check_branch
      %40 = sbr.rel (0) target = $region17
    $region16: #{_ucvme_forward_impl.1} parent=1 // pred_region
      %s42 = ssub.s32 512, 512
      %43 = vsyncadd [#allocation5], %s42
      %s44 = sshll.u32 [#allocation6], 4
      %s45 = int_to_ptr.vmem [resolvable:$true] %s44
      %50 = dma.hbm_to_vmem [thread:$0]  %s3, 512, %s45, [#allocation5], 128, 128, 8
    $region17: #{_ucvme_forward_impl.1} parent=1 // pred_fallthru
      _
    // Predicated region
    $region18: #{_ucvme_forward_impl.1} parent=1 // pred_check
      _
    $region19: #{_ucvme_forward_impl.1} parent=1 // pred_check_branch
      %52 = sbr.rel (0) target = $region21
    $region20: #{_ucvme_forward_impl.1} parent=1 // pred_region
      _
    $region21: #{_ucvme_forward_impl.1} parent=1 // pred_fallthru
      _
    // Predicated region
    $region22: #{_ucvme_forward_impl.1} parent=1 // pred_check
      _
    $region23: #{_ucvme_forward_impl.1} parent=1 // pred_check_branch
      %54 = sbr.rel (0) target = $region25
    $region24: #{_ucvme_forward_impl.1} parent=1 // pred_region
      %s56 = ssub.s32 512, 512
      %57 = vsyncadd [#allocation8], %s56
      %s58 = sshll.u32 [#allocation7], 4
      %s59 = int_to_ptr.vmem [resolvable:$true] %s58
      %64 = dma.hbm_to_vmem [thread:$0]  %s5, 512, %s59, [#allocation8], 128, 128, 8
    $region25: #{_ucvme_forward_impl.1} parent=1 // pred_fallthru
      _
    // Predicated region
    $region26: #{_ucvme_forward_impl.1} parent=1 // pred_check
      _
    $region27: #{_ucvme_forward_impl.1} parent=1 // pred_check_branch
      %66 = sbr.rel (0) target = $region29
    $region28: #{_ucvme_forward_impl.1} parent=1 // pred_region
      _
    $region29: #{_ucvme_forward_impl.1} parent=1 // pred_fallthru
      _
    // Predicated region
    $region30: #{_ucvme_forward_impl.1} parent=1 // pred_check
      _
    $region31: #{_ucvme_forward_impl.1} parent=1 // pred_check_branch
      %68 = sbr.rel (0) target = $region33
    $region32: #{_ucvme_forward_impl.1} parent=1 // pred_region
      %69 = dma.done [#allocation3], 128
    $region33: #{_ucvme_forward_impl.1} parent=1 // pred_fallthru
      _
    // Predicated region
    $region34: #{_ucvme_forward_impl.1} parent=1 // pred_check
      _
    $region35: #{_ucvme_forward_impl.1} parent=1 // pred_check_branch
      %71 = sbr.rel (0) target = $region37
    $region36: #{_ucvme_forward_impl.1} parent=1 // pred_region
      %72 = dma.done [#allocation5], 256
    $region37: #{_ucvme_forward_impl.1} parent=1 // pred_fallthru
      _
    // Predicated region
    $region38: #{_ucvme_forward_impl.1} parent=1 // pred_check
      _
    $region39: #{_ucvme_forward_impl.1} parent=1 // pred_check_branch
      %74 = sbr.rel (0) target = $region41
    $region40: #{_ucvme_forward_impl.1} parent=1 // pred_region
      %75 = dma.done [#allocation5], 512
    $region41: #{_ucvme_forward_impl.1} parent=1 // pred_fallthru
      _
    // Predicated region
    $region42: #{_ucvme_forward_impl.1} parent=1 // pred_check
      _
    $region43: #{_ucvme_forward_impl.1} parent=1 // pred_check_branch
      %77 = sbr.rel (0) target = $region45
    $region44: #{_ucvme_forward_impl.1} parent=1 // pred_region
      %78 = dma.done [#allocation8], 512
    $region45: #{_ucvme_forward_impl.1} parent=1 // pred_fallthru
      _
    %v79 = vld [vmem:[#allocation2] sm:$0xff]
    %v80 = vld [vmem:[#allocation4] sm:$0xff]
    %v81 = vld [vmem:[#allocation4 + $0x8] sm:$0xff]
    %v82 = vld [vmem:[%s2] sm:$0x1]
    %v84 = vlaneseq
    %v85 = vshrl.u32 %v84, 7
    %v86 = vsub.s32 0, %v85
    %v87 = vrot.slane %v82, %v86
    %vm89 = vcmask 130048
    %v91 = vsel %vm89, %v79, 0
    %93 = vmatprep.subr.mxu0 0.0
    %94 = vmatpush1.msra.mxu0 %v80
    %95 = vmatprep.subr.mxu0 0.0
    %96 = vmatpush1.msra.mxu0 %v81
    %97 = vmatprep.subr.mxu0 0.0
    %98 = vmatpush1.msra.mxu0 0.0
    %99 = vmatprep.subr.mxu0 0.0
    %100 = vmatpush1.msra.mxu0 0.0
    %101 = vmatprep.subr.mxu0 0.0
    %102 = vmatpush1.msra.mxu0 0.0
    %103 = vmatprep.subr.mxu0 0.0
    %104 = vmatpush1.msra.mxu0 0.0
    %105 = vmatprep.subr.mxu0 0.0
    %106 = vmatpush1.msra.mxu0 0.0
    %107 = vmatprep.subr.mxu0 0.0
    %108 = vmatpush1.msra.mxu0 0.0
    %109 = vmatprep.subr.mxu0 0.0
    %110 = vmatpush1.msra.mxu0 0.0
    %111 = vmatprep.subr.mxu0 0.0
    %112 = vmatpush1.msra.mxu0 0.0
    %113 = vmatprep.subr.mxu0 0.0
    %114 = vmatpush1.msra.mxu0 0.0
    %115 = vmatprep.subr.mxu0 0.0
    %116 = vmatpush1.msra.mxu0 0.0
    %117 = vmatprep.subr.mxu0 0.0
    %118 = vmatpush1.msra.mxu0 0.0
    %119 = vmatprep.subr.mxu0 0.0
    %120 = vmatpush1.msra.mxu0 0.0
    %121 = vmatprep.subr.mxu0 0.0
    %122 = vmatpush1.msra.mxu0 0.0
    %123 = vmatprep.subr.mxu0 0.0
    %124 = vmatpush1.msra.mxu0 0.0
    %125 = vmatprep.subr.mxu0 0.0
    %126 = vmatpush1.msra.mxu0 0.0
    %127 = vmatprep.subr.mxu0 0.0
    %128 = vmatpush1.msra.mxu0 0.0
    %129 = vmatprep.subr.mxu0 0.0
    %130 = vmatpush1.msra.mxu0 0.0
    %131 = vmatprep.subr.mxu0 0.0
    %132 = vmatpush1.msra.mxu0 0.0
    %133 = vmatprep.subr.mxu0 0.0
    %134 = vmatpush1.msra.mxu0 0.0
    %135 = vmatprep.subr.mxu0 0.0
    %136 = vmatpush1.msra.mxu0 0.0
    %137 = vmatprep.subr.mxu0 0.0
    %138 = vmatpush1.msra.mxu0 0.0
    %139 = vmatprep.subr.mxu0 0.0
    %140 = vmatpush1.msra.mxu0 0.0
    %141 = vmatprep.subr.mxu0 0.0
    %142 = vmatpush1.msra.mxu0 0.0
    %143 = vmatprep.subr.mxu0 0.0
    %144 = vmatpush1.msra.mxu0 0.0
    %145 = vmatprep.subr.mxu0 0.0
    %146 = vmatpush1.msra.mxu0 0.0
    %147 = vmatprep.subr.mxu0 0.0
    %148 = vmatpush1.msra.mxu0 0.0
    %149 = vmatprep.subr.mxu0 0.0
    %150 = vmatpush1.msra.mxu0 0.0
    %151 = vmatprep.subr.mxu0 0.0
    %152 = vmatpush1.msra.mxu0 0.0
    %153 = vmatprep.subr.mxu0 0.0
    %154 = vmatpush1.msra.mxu0 0.0
    %155 = vmatprep.subr.mxu0 0.0
    %156 = vmatpush1.msra.mxu0 0.0
    %157 = vmatprep.mubr.f32.mxu0 0.0
    %158 = vmatmul.mubr.f32.gmra.mrb[0].mxu0 %v91
    %v159 = vpop.f32.mrb[0].mxu0
    %v160 = vadd.f32 %v87, %v159
    %v161 = vpop.f32.mrb[0].mxu0
    %162 = vdwg.mxu0
    %v163 = vmax.f32 %v160, 0.0
    %v164 = vld [vmem:[#allocation6] sm:$0xff]
    %v165 = vld [vmem:[#allocation6 + $0x8] sm:$0xff]
    %v166 = vld [vmem:[#allocation6 + $0x10] sm:$0xff]
    %v167 = vld [vmem:[#allocation6 + $0x18] sm:$0xff]
    %v168 = vld [vmem:[%s4] sm:$0x1]
    %v170 = vlaneseq
    %v171 = vshrl.u32 %v170, 7
    %v172 = vsub.s32 0, %v171
    %v173 = vrot.slane %v168, %v172
    %vm175 = vcmask 261120
    %v177 = vsel %vm175, %v163, 0
    %179 = vmatprep.subr.mxu0 0.0
    %180 = vmatpush1.msra.mxu0 %v164
    %181 = vmatprep.subr.mxu0 0.0
    %182 = vmatpush1.msra.mxu0 %v165
    %183 = vmatprep.subr.mxu0 0.0
    %184 = vmatpush1.msra.mxu0 %v166
    %185 = vmatprep.subr.mxu0 0.0
    %186 = vmatpush1.msra.mxu0 %v167
    %187 = vmatprep.subr.mxu0 0.0
    %188 = vmatpush1.msra.mxu0 0.0
    %189 = vmatprep.subr.mxu0 0.0
    %190 = vmatpush1.msra.mxu0 0.0
    %191 = vmatprep.subr.mxu0 0.0
    %192 = vmatpush1.msra.mxu0 0.0
    %193 = vmatprep.subr.mxu0 0.0
    %194 = vmatpush1.msra.mxu0 0.0
    %195 = vmatprep.subr.mxu0 0.0
    %196 = vmatpush1.msra.mxu0 0.0
    %197 = vmatprep.subr.mxu0 0.0
    %198 = vmatpush1.msra.mxu0 0.0
    %199 = vmatprep.subr.mxu0 0.0
    %200 = vmatpush1.msra.mxu0 0.0
    %201 = vmatprep.subr.mxu0 0.0
    %202 = vmatpush1.msra.mxu0 0.0
    %203 = vmatprep.subr.mxu0 0.0
    %204 = vmatpush1.msra.mxu0 0.0
    %205 = vmatprep.subr.mxu0 0.0
    %206 = vmatpush1.msra.mxu0 0.0
    %207 = vmatprep.subr.mxu0 0.0
    %208 = vmatpush1.msra.mxu0 0.0
    %209 = vmatprep.subr.mxu0 0.0
    %210 = vmatpush1.msra.mxu0 0.0
    %211 = vmatprep.subr.mxu0 0.0
    %212 = vmatpush1.msra.mxu0 0.0
    %213 = vmatprep.subr.mxu0 0.0
    %214 = vmatpush1.msra.mxu0 0.0
    %215 = vmatprep.subr.mxu0 0.0
    %216 = vmatpush1.msra.mxu0 0.0
    %217 = vmatprep.subr.mxu0 0.0
    %218 = vmatpush1.msra.mxu0 0.0
    %219 = vmatprep.subr.mxu0 0.0
    %220 = vmatpush1.msra.mxu0 0.0
    %221 = vmatprep.subr.mxu0 0.0
    %222 = vmatpush1.msra.mxu0 0.0
    %223 = vmatprep.subr.mxu0 0.0
    %224 = vmatpush1.msra.mxu0 0.0
    %225 = vmatprep.subr.mxu0 0.0
    %226 = vmatpush1.msra.mxu0 0.0
    %227 = vmatprep.subr.mxu0 0.0
    %228 = vmatpush1.msra.mxu0 0.0
    %229 = vmatprep.subr.mxu0 0.0
    %230 = vmatpush1.msra.mxu0 0.0
    %231 = vmatprep.subr.mxu0 0.0
    %232 = vmatpush1.msra.mxu0 0.0
    %233 = vmatprep.subr.mxu0 0.0
    %234 = vmatpush1.msra.mxu0 0.0
    %235 = vmatprep.subr.mxu0 0.0
    %236 = vmatpush1.msra.mxu0 0.0
    %237 = vmatprep.subr.mxu0 0.0
    %238 = vmatpush1.msra.mxu0 0.0
    %239 = vmatprep.subr.mxu0 0.0
    %240 = vmatpush1.msra.mxu0 0.0
    %241 = vmatprep.subr.mxu0 0.0
    %242 = vmatpush1.msra.mxu0 0.0
    %243 = vmatprep.mubr.f32.mxu0 0.0
    %244 = vmatmul.mubr.f32.gmra.mrb[0].mxu0 %v177
    %v245 = vpop.f32.mrb[0].mxu0
    %v246 = vadd.f32 %v173, %v245
    %v247 = vpop.f32.mrb[0].mxu0
    %248 = vdwg.mxu0
    %v249 = vmax.f32 %v246, 0.0
    %v250 = vld [vmem:[#allocation7] sm:$0xff]
    %v251 = vld [vmem:[#allocation7 + $0x8] sm:$0xff]
    %v252 = vld [vmem:[#allocation7 + $0x10] sm:$0xff]
    %v253 = vld [vmem:[#allocation7 + $0x18] sm:$0xff]
    %v254 = vld [vmem:[%s6] sm:$0x1]
    %v256 = vlaneseq
    %v257 = vshrl.u32 %v256, 7
    %v258 = vsub.s32 0, %v257
    %v259 = vrot.slane %v254, %v258
    %v262 = vsel %vm175, %v249, 0
    %264 = vmatprep.subr.mxu0 0.0
    %265 = vmatpush1.msra.mxu0 %v250
    %266 = vmatprep.subr.mxu0 0.0
    %267 = vmatpush1.msra.mxu0 %v251
    %268 = vmatprep.subr.mxu0 0.0
    %269 = vmatpush1.msra.mxu0 %v252
    %270 = vmatprep.subr.mxu0 0.0
    %271 = vmatpush1.msra.mxu0 %v253
    %272 = vmatprep.subr.mxu0 0.0
    %273 = vmatpush1.msra.mxu0 0.0
    %274 = vmatprep.subr.mxu0 0.0
    %275 = vmatpush1.msra.mxu0 0.0
    %276 = vmatprep.subr.mxu0 0.0
    %277 = vmatpush1.msra.mxu0 0.0
    %278 = vmatprep.subr.mxu0 0.0
    %279 = vmatpush1.msra.mxu0 0.0
    %280 = vmatprep.subr.mxu0 0.0
    %281 = vmatpush1.msra.mxu0 0.0
    %282 = vmatprep.subr.mxu0 0.0
    %283 = vmatpush1.msra.mxu0 0.0
    %284 = vmatprep.subr.mxu0 0.0
    %285 = vmatpush1.msra.mxu0 0.0
    %286 = vmatprep.subr.mxu0 0.0
    %287 = vmatpush1.msra.mxu0 0.0
    %288 = vmatprep.subr.mxu0 0.0
    %289 = vmatpush1.msra.mxu0 0.0
    %290 = vmatprep.subr.mxu0 0.0
    %291 = vmatpush1.msra.mxu0 0.0
    %292 = vmatprep.subr.mxu0 0.0
    %293 = vmatpush1.msra.mxu0 0.0
    %294 = vmatprep.subr.mxu0 0.0
    %295 = vmatpush1.msra.mxu0 0.0
    %296 = vmatprep.subr.mxu0 0.0
    %297 = vmatpush1.msra.mxu0 0.0
    %298 = vmatprep.subr.mxu0 0.0
    %299 = vmatpush1.msra.mxu0 0.0
    %300 = vmatprep.subr.mxu0 0.0
    %301 = vmatpush1.msra.mxu0 0.0
    %302 = vmatprep.subr.mxu0 0.0
    %303 = vmatpush1.msra.mxu0 0.0
    %304 = vmatprep.subr.mxu0 0.0
    %305 = vmatpush1.msra.mxu0 0.0
    %306 = vmatprep.subr.mxu0 0.0
    %307 = vmatpush1.msra.mxu0 0.0
    %308 = vmatprep.subr.mxu0 0.0
    %309 = vmatpush1.msra.mxu0 0.0
    %310 = vmatprep.subr.mxu0 0.0
    %311 = vmatpush1.msra.mxu0 0.0
    %312 = vmatprep.subr.mxu0 0.0
    %313 = vmatpush1.msra.mxu0 0.0
    %314 = vmatprep.subr.mxu0 0.0
    %315 = vmatpush1.msra.mxu0 0.0
    %316 = vmatprep.subr.mxu0 0.0
    %317 = vmatpush1.msra.mxu0 0.0
    %318 = vmatprep.subr.mxu0 0.0
    %319 = vmatpush1.msra.mxu0 0.0
    %320 = vmatprep.subr.mxu0 0.0
    %321 = vmatpush1.msra.mxu0 0.0
    %322 = vmatprep.subr.mxu0 0.0
    %323 = vmatpush1.msra.mxu0 0.0
    %324 = vmatprep.subr.mxu0 0.0
    %325 = vmatpush1.msra.mxu0 0.0
    %326 = vmatprep.subr.mxu0 0.0
    %327 = vmatpush1.msra.mxu0 0.0
    %328 = vmatprep.mubr.f32.mxu0 0.0
    %329 = vmatmul.mubr.f32.gmra.mrb[0].mxu0 %v262
    %v330 = vpop.f32.mrb[0].mxu0
    %v331 = vadd.f32 %v259, %v330
    %v332 = vpop.f32.mrb[0].mxu0
    %333 = vdwg.mxu0
    %334 = vst [vmem:[%s7] sm:$0xff] %v331
    // Predicated region
    $region46: #{_ucvme_forward_impl.1} parent=1 // pred_check
      _
    $region47: #{_ucvme_forward_impl.1} parent=1 // pred_check_branch
      %336 = sbr.rel (0) target = $region49
    $region48: #{_ucvme_forward_impl.1} parent=1 // pred_region
      _
    $region49: #{_ucvme_forward_impl.1} parent=1 // pred_fallthru
      _
    // Predicated region
    $region50: #{_ucvme_forward_impl.1} parent=1 // pred_check
      _
    $region51: #{_ucvme_forward_impl.1} parent=1 // pred_check_branch
      %338 = sbr.rel (0) target = $region53
    $region52: #{_ucvme_forward_impl.1} parent=1 // pred_region
      _
    $region53: #{_ucvme_forward_impl.1} parent=1 // pred_fallthru
      _
    %339 = vsyncpa [#allocation3], 1
    %340 = vsyncpa [#allocation5], 1
    %341 = vsyncpa [#allocation8], 1

</llo_original>
